<compile_context>
chip_gen: v7x
topology: tpu7x:2x2x1
jax: 0.10.0
libtpu: 0.0.40
codegen_flags: <defaults>
</compile_context>

<pallas_src>
import jax
import jax.numpy as jnp
import numpy as np
from jax import lax
from jax.experimental import pallas as pl
from jax.experimental.pallas import tpu as pltpu

# Placement of the plane inside the halo scratch: sublane/lane aligned
# (8 / 128) so the DMA destination and the centre-tap read are tile aligned,
# while still leaving >=1 zero row/col of halo on every side.
_ROW0 = 8
_COL0 = 128


def _make_srm_kernel(planes_per_step):
    P = planes_per_step

    def kernel(x_hbm, o_ref, xp_ref, sem):
        # x_hbm : ANY  (NC, H, Wp)        full planes array, stays in HBM
        # o_ref : VMEM (P, H, Wp)         output block for this grid step
        # xp_ref: VMEM (2, H+9, Wp+129)   2-slot zero-halo scratch
        # sem   : DMA semaphores, shape (2,)
        _, H, Wp = o_ref.shape
        base = pl.program_id(0) * P
        dt = xp_ref.dtype
        top, bot = _ROW0 - 1, _ROW0 + H
        lef, rig = _COL0 - 1, _COL0 + Wp

        # Zero ONLY the 1-pixel halo ring of both slots (cheap: 2 rows + 2
        # cols).  Done every grid step -- a one-time init gated on
        # program_id==0 would be wrong under megacore 'parallel' sharding.
        for slot in range(2):
            zrow = jnp.zeros((1, Wp + 2), dt)
            zcol = jnp.zeros((H, 1), dt)
            xp_ref[slot, pl.ds(top, 1), pl.ds(lef, Wp + 2)] = zrow
            xp_ref[slot, pl.ds(bot, 1), pl.ds(lef, Wp + 2)] = zrow
            xp_ref[slot, pl.ds(_ROW0, H), pl.ds(lef, 1)] = zcol
            xp_ref[slot, pl.ds(_ROW0, H), pl.ds(rig, 1)] = zcol

        def copy_in(p, slot):
            # HBM plane -> scratch interior (halo ring untouched).
            return pltpu.make_async_copy(
                x_hbm.at[base + p],
                xp_ref.at[slot, pl.ds(_ROW0, H), pl.ds(_COL0, Wp)],
                sem.at[slot])

        copy_in(0, 0).start()                      # prime slot 0
        for p in range(P):                         # static unroll; P small
            slot = p & 1
            copy_in(p, slot).wait()
            if p + 1 < P:
                copy_in(p + 1, 1 - slot).start()   # prefetch next plane

            def win(dy, dx, _slot=slot):
                return xp_ref[_slot,
                              pl.ds(_ROW0 - 1 + dy, H),
                              pl.ds(_COL0 - 1 + dx, Wp)].astype(jnp.float32)

            center = win(1, 1)
            cross = win(0, 1) + win(2, 1) + win(1, 0) + win(1, 2)   # N+S+W+E
            corners = win(0, 0) + win(0, 2) + win(2, 0) + win(2, 2)
            # TODO(synk): optional v7x-only column-sum factoring to cut the
            # shifted-window load count once HBM is no longer the bound.
            o_ref[p] = (3.0 * cross - corners
                        - 8.0 * center).astype(o_ref.dtype)

    return kernel


def _pick_planes_per_step(nc, plane_bytes):
    """Largest divisor of nc with ~<=2 MiB of planes/step, keeping >=2 steps."""
    target = 2 << 20
    p_max = int(max(1, min(nc, 8, target // max(plane_bytes, 1))))
    p = 1
    for cand in range(p_max, 0, -1):
        if nc % cand == 0:
            p = cand
            break
    if nc // p < 2:   # keep both v7x TensorCores busy when nc allows it
        for cand in range(p - 1, 0, -1):
            if nc % cand == 0 and nc // cand >= 2:
                p = cand
                break
    return p


def srm_conv(x):
    """F.conv2d(x, srm_weight, padding=1) for the fixed SRM weight.

    x: (N, 3, H, W)  ->  (N, 3, H, W), same dtype.
    """
    n, c, h, w = x.shape
    assert c == 3, "SRMConv expects 3 input channels"
    nc = n * c
    planes = x.reshape(nc, h, w)           # depthwise: nc independent planes

    # Lane-dense last dim: pad W to a multiple of 128.  The zero padding is
    # exactly conv2d's own zero padding for the kept columns, so the result
    # sliced back to W is exact.
    wp = ((w + 127) // 128) * 128
    if wp != w:
        planes = jnp.pad(planes, ((0, 0), (0, 0), (0, wp - w)))

    esize = planes.dtype.itemsize
    p_step = _pick_planes_per_step(nc, h * wp * esize)
    grid = (nc // p_step,)

    # Scratch: 2 slots of (H+9, Wp+129) (8/128-aligned interior offset).
    hs, ws = h + _ROW0 + 1, wp + _COL0 + 1
    hs_pad, ws_pad = ((hs + 7) // 8) * 8, ((ws + 127) // 128) * 128
    need = (2 * p_step * h * wp + 2 * hs_pad * ws_pad) * esize + (2 << 20)
    vmem_limit = int(min(max(need, 32 << 20), 48 << 20))
    # TODO(synk): add an H-tiling grid axis (1-row halo fetched from the
    # neighbouring rows in HBM) for very large planes so the whole-plane
    # scratch + output blocks fit v7x's 64 MiB VMEM.

    out = pl.pallas_call(
        _make_srm_kernel(p_step),
        out_shape=jax.ShapeDtypeStruct((nc, h, wp), planes.dtype),
        grid_spec=pltpu.PrefetchScalarGridSpec(
            num_scalar_prefetch=0,
            grid=grid,
            in_specs=[pl.BlockSpec(memory_space=pl.ANY)],
            out_specs=pl.BlockSpec((p_step, h, wp), lambda i: (i, 0, 0)),
            scratch_shapes=[
                pltpu.VMEM((2, hs, ws), planes.dtype),
                pltpu.SemaphoreType.DMA((2,)),
            ],
        ),
        compiler_params=pltpu.CompilerParams(
            dimension_semantics=("parallel",),
            vmem_limit_bytes=vmem_limit),
    )(planes)

    if wp != w:
        out = out[:, :, :w]
    return out.reshape(n, c, h, w)


def _get_srm_weight():
    """Replicates SRMConv._get_srm_kernels(): (3, 3, 3, 3) float32."""
    filter1 = np.array([[-1, 2, -1], [2, -4, 2], [-1, 2, -1]], dtype=np.float32)
    filter2 = np.array([[0, 0, 0], [1, -2, 1], [0, 0, 0]], dtype=np.float32)
    filter3 = np.array([[0, 1, 0], [0, -2, 0], [0, 1, 0]], dtype=np.float32)
    srm = np.zeros((3, 3, 3, 3), dtype=np.float32)
    for i in range(3):
        srm[i, i, :, :] = filter1 + filter2 + filter3
    return jnp.asarray(srm)


def _reference(x):
    """Pure-JAX reference: lax conv with the full (3,3,3,3) SRM weight."""
    return lax.conv_general_dilated(
        x, _get_srm_weight(), window_strides=(1, 1),
        padding=((1, 1), (1, 1)),
        dimension_numbers=("NCHW", "OIHW", "NCHW"))


if __name__ == "__main__":
    key = jax.random.PRNGKey(0)
    x = jax.random.normal(key, (2, 3, 16, 16), dtype=jnp.float32)

    out = jax.jit(srm_conv)(x)
    out = jax.block_until_ready(out)

    ref = _reference(x)
    np.testing.assert_allclose(np.asarray(out), np.asarray(ref),
                               rtol=1e-5, atol=1e-5)
    print("KERNEL_OK")
</pallas_src>

<mosaic_0001>
module attributes {stable_mosaic.version = 11 : i64} {
  func.func @kernel(%arg0: i32, %arg1: memref<6x16x128xf32, #tpu.memory_space<any>>, %arg2: memref<3x16x128xf32, #tpu.memory_space<vmem>>, %arg3: memref<2x25x257xf32, #tpu.memory_space<vmem>>, %arg4: memref<2x!tpu.dma_semaphore, #tpu.memory_space<semaphore_mem>>) attributes {dimension_semantics = [#tpu.dimension_semantics<parallel>], iteration_bounds = array<i64: 2>, scalar_prefetch = 0 : i64, scratch_operands = 2 : i64, tpu.core_type = #tpu.core_type<tc>, window_params = [{}, {transform_indices = @transform_1, window_bounds = array<i64: 3, 16, 128>}]} {
    %c3_i32 = arith.constant 3 : i32
    %0 = arith.muli %arg0, %c3_i32 : i32
    %cst = arith.constant 0.000000e+00 : f32
    %1 = vector.broadcast %cst : f32 to vector<1x130xf32>
    %cst_0 = arith.constant 0.000000e+00 : f32
    %2 = vector.broadcast %cst_0 : f32 to vector<16x1xf32>
    %c0 = arith.constant 0 : index
    %c7 = arith.constant 7 : index
    %c127 = arith.constant 127 : index
    %3 = vector.load %arg3[%c0, %c7, %c127] : memref<2x25x257xf32, #tpu.memory_space<vmem>>, vector<1x1x130xf32>
    %4 = vector.shape_cast %3 : vector<1x1x130xf32> to vector<1x130xf32>
    %5 = vector.shape_cast %1 : vector<1x130xf32> to vector<1x1x130xf32>
    tpu.vector_store %arg3[%c0, %c7, %c127], %5 {strides = array<i32>} : memref<2x25x257xf32, #tpu.memory_space<vmem>>, vector<1x1x130xf32>,
    %c0_1 = arith.constant 0 : index
    %c24 = arith.constant 24 : index
    %c127_2 = arith.constant 127 : index
    %6 = vector.load %arg3[%c0_1, %c24, %c127_2] : memref<2x25x257xf32, #tpu.memory_space<vmem>>, vector<1x1x130xf32>
    %7 = vector.shape_cast %6 : vector<1x1x130xf32> to vector<1x130xf32>
    %8 = vector.shape_cast %1 : vector<1x130xf32> to vector<1x1x130xf32>
    tpu.vector_store %arg3[%c0_1, %c24, %c127_2], %8 {strides = array<i32>} : memref<2x25x257xf32, #tpu.memory_space<vmem>>, vector<1x1x130xf32>,
    %c0_3 = arith.constant 0 : index
    %c8 = arith.constant 8 : index
    %c127_4 = arith.constant 127 : index
    %9 = vector.load %arg3[%c0_3, %c8, %c127_4] : memref<2x25x257xf32, #tpu.memory_space<vmem>>, vector<1x16x1xf32>
    %10 = vector.shape_cast %9 : vector<1x16x1xf32> to vector<16x1xf32>
    %11 = vector.shape_cast %2 : vector<16x1xf32> to vector<1x16x1xf32>
    tpu.vector_store %arg3[%c0_3, %c8, %c127_4], %11 {strides = array<i32>} : memref<2x25x257xf32, #tpu.memory_space<vmem>>, vector<1x16x1xf32>,
    %c0_5 = arith.constant 0 : index
    %c8_6 = arith.constant 8 : index
    %c256 = arith.constant 256 : index
    %12 = vector.load %arg3[%c0_5, %c8_6, %c256] : memref<2x25x257xf32, #tpu.memory_space<vmem>>, vector<1x16x1xf32>
    %13 = vector.shape_cast %12 : vector<1x16x1xf32> to vector<16x1xf32>
    %14 = vector.shape_cast %2 : vector<16x1xf32> to vector<1x16x1xf32>
    tpu.vector_store %arg3[%c0_5, %c8_6, %c256], %14 {strides = array<i32>} : memref<2x25x257xf32, #tpu.memory_space<vmem>>, vector<1x16x1xf32>,
    %cst_7 = arith.constant 0.000000e+00 : f32
    %15 = vector.broadcast %cst_7 : f32 to vector<1x130xf32>
    %cst_8 = arith.constant 0.000000e+00 : f32
    %16 = vector.broadcast %cst_8 : f32 to vector<16x1xf32>
    %c1 = arith.constant 1 : index
    %c7_9 = arith.constant 7 : index
    %c127_10 = arith.constant 127 : index
    %17 = vector.load %arg3[%c1, %c7_9, %c127_10] : memref<2x25x257xf32, #tpu.memory_space<vmem>>, vector<1x1x130xf32>
    %18 = vector.shape_cast %17 : vector<1x1x130xf32> to vector<1x130xf32>
    %19 = vector.shape_cast %15 : vector<1x130xf32> to vector<1x1x130xf32>
    tpu.vector_store %arg3[%c1, %c7_9, %c127_10], %19 {strides = array<i32>} : memref<2x25x257xf32, #tpu.memory_space<vmem>>, vector<1x1x130xf32>,
    %c1_11 = arith.constant 1 : index
    %c24_12 = arith.constant 24 : index
    %c127_13 = arith.constant 127 : index
    %20 = vector.load %arg3[%c1_11, %c24_12, %c127_13] : memref<2x25x257xf32, #tpu.memory_space<vmem>>, vector<1x1x130xf32>
    %21 = vector.shape_cast %20 : vector<1x1x130xf32> to vector<1x130xf32>
    %22 = vector.shape_cast %15 : vector<1x130xf32> to vector<1x1x130xf32>
    tpu.vector_store %arg3[%c1_11, %c24_12, %c127_13], %22 {strides = array<i32>} : memref<2x25x257xf32, #tpu.memory_space<vmem>>, vector<1x1x130xf32>,
    %c1_14 = arith.constant 1 : index
    %c8_15 = arith.constant 8 : index
    %c127_16 = arith.constant 127 : index
    %23 = vector.load %arg3[%c1_14, %c8_15, %c127_16] : memref<2x25x257xf32, #tpu.memory_space<vmem>>, vector<1x16x1xf32>
    %24 = vector.shape_cast %23 : vector<1x16x1xf32> to vector<16x1xf32>
    %25 = vector.shape_cast %16 : vector<16x1xf32> to vector<1x16x1xf32>
    tpu.vector_store %arg3[%c1_14, %c8_15, %c127_16], %25 {strides = array<i32>} : memref<2x25x257xf32, #tpu.memory_space<vmem>>, vector<1x16x1xf32>,
    %c1_17 = arith.constant 1 : index
    %c8_18 = arith.constant 8 : index
    %c256_19 = arith.constant 256 : index
    %26 = vector.load %arg3[%c1_17, %c8_18, %c256_19] : memref<2x25x257xf32, #tpu.memory_space<vmem>>, vector<1x16x1xf32>
    %27 = vector.shape_cast %26 : vector<1x16x1xf32> to vector<16x1xf32>
    %28 = vector.shape_cast %16 : vector<16x1xf32> to vector<1x16x1xf32>
    tpu.vector_store %arg3[%c1_17, %c8_18, %c256_19], %28 {strides = array<i32>} : memref<2x25x257xf32, #tpu.memory_space<vmem>>, vector<1x16x1xf32>,
    %c0_i32 = arith.constant 0 : i32
    %29 = arith.addi %0, %c0_i32 : i32
    %c0_i32_20 = arith.constant 0 : i32
    %c0_i32_21 = arith.constant 0 : i32
    %c0_i32_22 = arith.constant 0 : i32
    %c0_i32_23 = arith.constant 0 : i32
    %30 = tpu.memref_slice %arg1[%29, %c0_i32_22, %c0_i32_23] : memref<6x16x128xf32, #tpu.memory_space<any>> -> memref<1x16x128xf32, #tpu.memory_space<any>>
    %31 = tpu.memref_squeeze %30 : memref<1x16x128xf32, #tpu.memory_space<any>> -> memref<16x128xf32, #tpu.memory_space<any>>
    %c8_i32 = arith.constant 8 : i32
    %c128_i32 = arith.constant 128 : i32
    %32 = tpu.memref_slice %arg3[%c0_i32_20, %c8_i32, %c128_i32] : memref<2x25x257xf32, #tpu.memory_space<vmem>> -> memref<1x16x128xf32, #tpu.memory_space<vmem>>
    %33 = tpu.memref_squeeze %32 : memref<1x16x128xf32, #tpu.memory_space<vmem>> -> memref<16x128xf32, #tpu.memory_space<vmem>>
    %34 = tpu.memref_slice %arg4[%c0_i32_21] : memref<2x!tpu.dma_semaphore, #tpu.memory_space<semaphore_mem>> -> memref<1x!tpu.dma_semaphore, #tpu.memory_space<semaphore_mem>>
    %35 = tpu.memref_squeeze %34 : memref<1x!tpu.dma_semaphore, #tpu.memory_space<semaphore_mem>> -> memref<!tpu.dma_semaphore, #tpu.memory_space<semaphore_mem>>
    tpu.enqueue_dma source(%31 : memref<16x128xf32, #tpu.memory_space<any>>) target(%33 : memref<16x128xf32, #tpu.memory_space<vmem>>) target_semaphore(%35 : memref<!tpu.dma_semaphore, #tpu.memory_space<semaphore_mem>>)
    %c0_i32_24 = arith.constant 0 : i32
    %36 = arith.addi %0, %c0_i32_24 : i32
    %c0_i32_25 = arith.constant 0 : i32
    %c0_i32_26 = arith.constant 0 : i32
    %c0_i32_27 = arith.constant 0 : i32
    %c0_i32_28 = arith.constant 0 : i32
    %37 = tpu.memref_slice %arg1[%36, %c0_i32_27, %c0_i32_28] : memref<6x16x128xf32, #tpu.memory_space<any>> -> memref<1x16x128xf32, #tpu.memory_space<any>>
    %38 = tpu.memref_squeeze %37 : memref<1x16x128xf32, #tpu.memory_space<any>> -> memref<16x128xf32, #tpu.memory_space<any>>
    %c8_i32_29 = arith.constant 8 : i32
    %c128_i32_30 = arith.constant 128 : i32
    %39 = tpu.memref_slice %arg3[%c0_i32_25, %c8_i32_29, %c128_i32_30] : memref<2x25x257xf32, #tpu.memory_space<vmem>> -> memref<1x16x128xf32, #tpu.memory_space<vmem>>
    %40 = tpu.memref_squeeze %39 : memref<1x16x128xf32, #tpu.memory_space<vmem>> -> memref<16x128xf32, #tpu.memory_space<vmem>>
    %41 = tpu.memref_slice %arg4[%c0_i32_26] : memref<2x!tpu.dma_semaphore, #tpu.memory_space<semaphore_mem>> -> memref<1x!tpu.dma_semaphore, #tpu.memory_space<semaphore_mem>>
    %42 = tpu.memref_squeeze %41 : memref<1x!tpu.dma_semaphore, #tpu.memory_space<semaphore_mem>> -> memref<!tpu.dma_semaphore, #tpu.memory_space<semaphore_mem>>
    tpu.wait_dma2 semaphore(%42 : memref<!tpu.dma_semaphore, #tpu.memory_space<semaphore_mem>>) src(%38 : memref<16x128xf32, #tpu.memory_space<any>>) dst(%40 : memref<16x128xf32, #tpu.memory_space<vmem>>)
    %c1_i32 = arith.constant 1 : i32
    %43 = arith.addi %0, %c1_i32 : i32
    %c1_i32_31 = arith.constant 1 : i32
    %c1_i32_32 = arith.constant 1 : i32
    %c0_i32_33 = arith.constant 0 : i32
    %c0_i32_34 = arith.constant 0 : i32
    %44 = tpu.memref_slice %arg1[%43, %c0_i32_33, %c0_i32_34] : memref<6x16x128xf32, #tpu.memory_space<any>> -> memref<1x16x128xf32, #tpu.memory_space<any>>
    %45 = tpu.memref_squeeze %44 : memref<1x16x128xf32, #tpu.memory_space<any>> -> memref<16x128xf32, #tpu.memory_space<any>>
    %c8_i32_35 = arith.constant 8 : i32
    %c128_i32_36 = arith.constant 128 : i32
    %46 = tpu.memref_slice %arg3[%c1_i32_31, %c8_i32_35, %c128_i32_36] : memref<2x25x257xf32, #tpu.memory_space<vmem>> -> memref<1x16x128xf32, #tpu.memory_space<vmem>>
    %47 = tpu.memref_squeeze %46 : memref<1x16x128xf32, #tpu.memory_space<vmem>> -> memref<16x128xf32, #tpu.memory_space<vmem>>
    %48 = tpu.memref_slice %arg4[%c1_i32_32] : memref<2x!tpu.dma_semaphore, #tpu.memory_space<semaphore_mem>> -> memref<1x!tpu.dma_semaphore, #tpu.memory_space<semaphore_mem>>
    %49 = tpu.memref_squeeze %48 : memref<1x!tpu.dma_semaphore, #tpu.memory_space<semaphore_mem>> -> memref<!tpu.dma_semaphore, #tpu.memory_space<semaphore_mem>>
    tpu.enqueue_dma source(%45 : memref<16x128xf32, #tpu.memory_space<any>>) target(%47 : memref<16x128xf32, #tpu.memory_space<vmem>>) target_semaphore(%49 : memref<!tpu.dma_semaphore, #tpu.memory_space<semaphore_mem>>)
    %c0_37 = arith.constant 0 : index
    %c8_38 = arith.constant 8 : index
    %c128 = arith.constant 128 : index
    %50 = vector.load %arg3[%c0_37, %c8_38, %c128] : memref<2x25x257xf32, #tpu.memory_space<vmem>>, vector<1x16x128xf32>
    %51 = vector.shape_cast %50 : vector<1x16x128xf32> to vector<16x128xf32>
    %c0_39 = arith.constant 0 : index
    %c7_40 = arith.constant 7 : index
    %c128_41 = arith.constant 128 : index
    %52 = vector.load %arg3[%c0_39, %c7_40, %c128_41] : memref<2x25x257xf32, #tpu.memory_space<vmem>>, vector<1x16x128xf32>
    %53 = vector.shape_cast %52 : vector<1x16x128xf32> to vector<16x128xf32>
    %c0_42 = arith.constant 0 : index
    %c9 = arith.constant 9 : index
    %c128_43 = arith.constant 128 : index
    %54 = vector.load %arg3[%c0_42, %c9, %c128_43] : memref<2x25x257xf32, #tpu.memory_space<vmem>>, vector<1x16x128xf32>
    %55 = vector.shape_cast %54 : vector<1x16x128xf32> to vector<16x128xf32>
    %56 = arith.addf %53, %55 : vector<16x128xf32>
    %c0_44 = arith.constant 0 : index
    %c8_45 = arith.constant 8 : index
    %c127_46 = arith.constant 127 : index
    %57 = vector.load %arg3[%c0_44, %c8_45, %c127_46] : memref<2x25x257xf32, #tpu.memory_space<vmem>>, vector<1x16x128xf32>
    %58 = vector.shape_cast %57 : vector<1x16x128xf32> to vector<16x128xf32>
    %59 = arith.addf %56, %58 : vector<16x128xf32>
    %c0_47 = arith.constant 0 : index
    %c8_48 = arith.constant 8 : index
    %c129 = arith.constant 129 : index
    %60 = vector.load %arg3[%c0_47, %c8_48, %c129] : memref<2x25x257xf32, #tpu.memory_space<vmem>>, vector<1x16x128xf32>
    %61 = vector.shape_cast %60 : vector<1x16x128xf32> to vector<16x128xf32>
    %62 = arith.addf %59, %61 : vector<16x128xf32>
    %c0_49 = arith.constant 0 : index
    %c7_50 = arith.constant 7 : index
    %c127_51 = arith.constant 127 : index
    %63 = vector.load %arg3[%c0_49, %c7_50, %c127_51] : memref<2x25x257xf32, #tpu.memory_space<vmem>>, vector<1x16x128xf32>
    %64 = vector.shape_cast %63 : vector<1x16x128xf32> to vector<16x128xf32>
    %c0_52 = arith.constant 0 : index
    %c7_53 = arith.constant 7 : index
    %c129_54 = arith.constant 129 : index
    %65 = vector.load %arg3[%c0_52, %c7_53, %c129_54] : memref<2x25x257xf32, #tpu.memory_space<vmem>>, vector<1x16x128xf32>
    %66 = vector.shape_cast %65 : vector<1x16x128xf32> to vector<16x128xf32>
    %67 = arith.addf %64, %66 : vector<16x128xf32>
    %c0_55 = arith.constant 0 : index
    %c9_56 = arith.constant 9 : index
    %c127_57 = arith.constant 127 : index
    %68 = vector.load %arg3[%c0_55, %c9_56, %c127_57] : memref<2x25x257xf32, #tpu.memory_space<vmem>>, vector<1x16x128xf32>
    %69 = vector.shape_cast %68 : vector<1x16x128xf32> to vector<16x128xf32>
    %70 = arith.addf %67, %69 : vector<16x128xf32>
    %c0_58 = arith.constant 0 : index
    %c9_59 = arith.constant 9 : index
    %c129_60 = arith.constant 129 : index
    %71 = vector.load %arg3[%c0_58, %c9_59, %c129_60] : memref<2x25x257xf32, #tpu.memory_space<vmem>>, vector<1x16x128xf32>
    %72 = vector.shape_cast %71 : vector<1x16x128xf32> to vector<16x128xf32>
    %73 = arith.addf %70, %72 : vector<16x128xf32>
    %cst_61 = arith.constant 3.000000e+00 : f32
    %74 = vector.broadcast %cst_61 : f32 to vector<16x128xf32>
    %75 = arith.mulf %74, %62 : vector<16x128xf32>
    %76 = arith.subf %75, %73 : vector<16x128xf32>
    %cst_62 = arith.constant 8.000000e+00 : f32
    %77 = vector.broadcast %cst_62 : f32 to vector<16x128xf32>
    %78 = arith.mulf %77, %51 : vector<16x128xf32>
    %79 = arith.subf %76, %78 : vector<16x128xf32>
    %c0_63 = arith.constant 0 : index
    %c0_64 = arith.constant 0 : index
    %c0_65 = arith.constant 0 : index
    %80 = vector.load %arg2[%c0_63, %c0_64, %c0_65] : memref<3x16x128xf32, #tpu.memory_space<vmem>>, vector<1x16x128xf32>
    %81 = vector.shape_cast %80 : vector<1x16x128xf32> to vector<16x128xf32>
    %82 = vector.shape_cast %79 : vector<16x128xf32> to vector<1x16x128xf32>
    tpu.vector_store %arg2[%c0_63, %c0_64, %c0_65], %82 {strides = array<i32>} : memref<3x16x128xf32, #tpu.memory_space<vmem>>, vector<1x16x128xf32>,
    %c1_i32_66 = arith.constant 1 : i32
    %83 = arith.addi %0, %c1_i32_66 : i32
    %c1_i32_67 = arith.constant 1 : i32
    %c1_i32_68 = arith.constant 1 : i32
    %c0_i32_69 = arith.constant 0 : i32
    %c0_i32_70 = arith.constant 0 : i32
    %84 = tpu.memref_slice %arg1[%83, %c0_i32_69, %c0_i32_70] : memref<6x16x128xf32, #tpu.memory_space<any>> -> memref<1x16x128xf32, #tpu.memory_space<any>>
    %85 = tpu.memref_squeeze %84 : memref<1x16x128xf32, #tpu.memory_space<any>> -> memref<16x128xf32, #tpu.memory_space<any>>
    %c8_i32_71 = arith.constant 8 : i32
    %c128_i32_72 = arith.constant 128 : i32
    %86 = tpu.memref_slice %arg3[%c1_i32_67, %c8_i32_71, %c128_i32_72] : memref<2x25x257xf32, #tpu.memory_space<vmem>> -> memref<1x16x128xf32, #tpu.memory_space<vmem>>
    %87 = tpu.memref_squeeze %86 : memref<1x16x128xf32, #tpu.memory_space<vmem>> -> memref<16x128xf32, #tpu.memory_space<vmem>>
    %88 = tpu.memref_slice %arg4[%c1_i32_68] : memref<2x!tpu.dma_semaphore, #tpu.memory_space<semaphore_mem>> -> memref<1x!tpu.dma_semaphore, #tpu.memory_space<semaphore_mem>>
    %89 = tpu.memref_squeeze %88 : memref<1x!tpu.dma_semaphore, #tpu.memory_space<semaphore_mem>> -> memref<!tpu.dma_semaphore, #tpu.memory_space<semaphore_mem>>
    tpu.wait_dma2 semaphore(%89 : memref<!tpu.dma_semaphore, #tpu.memory_space<semaphore_mem>>) src(%85 : memref<16x128xf32, #tpu.memory_space<any>>) dst(%87 : memref<16x128xf32, #tpu.memory_space<vmem>>)
    %c2_i32 = arith.constant 2 : i32
    %90 = arith.addi %0, %c2_i32 : i32
    %c0_i32_73 = arith.constant 0 : i32
    %c0_i32_74 = arith.constant 0 : i32
    %c0_i32_75 = arith.constant 0 : i32
    %c0_i32_76 = arith.constant 0 : i32
    %91 = tpu.memref_slice %arg1[%90, %c0_i32_75, %c0_i32_76] : memref<6x16x128xf32, #tpu.memory_space<any>> -> memref<1x16x128xf32, #tpu.memory_space<any>>
    %92 = tpu.memref_squeeze %91 : memref<1x16x128xf32, #tpu.memory_space<any>> -> memref<16x128xf32, #tpu.memory_space<any>>
    %c8_i32_77 = arith.constant 8 : i32
    %c128_i32_78 = arith.constant 128 : i32
    %93 = tpu.memref_slice %arg3[%c0_i32_73, %c8_i32_77, %c128_i32_78] : memref<2x25x257xf32, #tpu.memory_space<vmem>> -> memref<1x16x128xf32, #tpu.memory_space<vmem>>
    %94 = tpu.memref_squeeze %93 : memref<1x16x128xf32, #tpu.memory_space<vmem>> -> memref<16x128xf32, #tpu.memory_space<vmem>>
    %95 = tpu.memref_slice %arg4[%c0_i32_74] : memref<2x!tpu.dma_semaphore, #tpu.memory_space<semaphore_mem>> -> memref<1x!tpu.dma_semaphore, #tpu.memory_space<semaphore_mem>>
    %96 = tpu.memref_squeeze %95 : memref<1x!tpu.dma_semaphore, #tpu.memory_space<semaphore_mem>> -> memref<!tpu.dma_semaphore, #tpu.memory_space<semaphore_mem>>
    tpu.enqueue_dma source(%92 : memref<16x128xf32, #tpu.memory_space<any>>) target(%94 : memref<16x128xf32, #tpu.memory_space<vmem>>) target_semaphore(%96 : memref<!tpu.dma_semaphore, #tpu.memory_space<semaphore_mem>>)
    %c1_79 = arith.constant 1 : index
    %c8_80 = arith.constant 8 : index
    %c128_81 = arith.constant 128 : index
    %97 = vector.load %arg3[%c1_79, %c8_80, %c128_81] : memref<2x25x257xf32, #tpu.memory_space<vmem>>, vector<1x16x128xf32>
    %98 = vector.shape_cast %97 : vector<1x16x128xf32> to vector<16x128xf32>
    %c1_82 = arith.constant 1 : index
    %c7_83 = arith.constant 7 : index
    %c128_84 = arith.constant 128 : index
    %99 = vector.load %arg3[%c1_82, %c7_83, %c128_84] : memref<2x25x257xf32, #tpu.memory_space<vmem>>, vector<1x16x128xf32>
    %100 = vector.shape_cast %99 : vector<1x16x128xf32> to vector<16x128xf32>
    %c1_85 = arith.constant 1 : index
    %c9_86 = arith.constant 9 : index
    %c128_87 = arith.constant 128 : index
    %101 = vector.load %arg3[%c1_85, %c9_86, %c128_87] : memref<2x25x257xf32, #tpu.memory_space<vmem>>, vector<1x16x128xf32>
    %102 = vector.shape_cast %101 : vector<1x16x128xf32> to vector<16x128xf32>
    %103 = arith.addf %100, %102 : vector<16x128xf32>
    %c1_88 = arith.constant 1 : index
    %c8_89 = arith.constant 8 : index
    %c127_90 = arith.constant 127 : index
    %104 = vector.load %arg3[%c1_88, %c8_89, %c127_90] : memref<2x25x257xf32, #tpu.memory_space<vmem>>, vector<1x16x128xf32>
    %105 = vector.shape_cast %104 : vector<1x16x128xf32> to vector<16x128xf32>
    %106 = arith.addf %103, %105 : vector<16x128xf32>
    %c1_91 = arith.constant 1 : index
    %c8_92 = arith.constant 8 : index
    %c129_93 = arith.constant 129 : index
    %107 = vector.load %arg3[%c1_91, %c8_92, %c129_93] : memref<2x25x257xf32, #tpu.memory_space<vmem>>, vector<1x16x128xf32>
    %108 = vector.shape_cast %107 : vector<1x16x128xf32> to vector<16x128xf32>
    %109 = arith.addf %106, %108 : vector<16x128xf32>
    %c1_94 = arith.constant 1 : index
    %c7_95 = arith.constant 7 : index
    %c127_96 = arith.constant 127 : index
    %110 = vector.load %arg3[%c1_94, %c7_95, %c127_96] : memref<2x25x257xf32, #tpu.memory_space<vmem>>, vector<1x16x128xf32>
    %111 = vector.shape_cast %110 : vector<1x16x128xf32> to vector<16x128xf32>
    %c1_97 = arith.constant 1 : index
    %c7_98 = arith.constant 7 : index
    %c129_99 = arith.constant 129 : index
    %112 = vector.load %arg3[%c1_97, %c7_98, %c129_99] : memref<2x25x257xf32, #tpu.memory_space<vmem>>, vector<1x16x128xf32>
    %113 = vector.shape_cast %112 : vector<1x16x128xf32> to vector<16x128xf32>
    %114 = arith.addf %111, %113 : vector<16x128xf32>
    %c1_100 = arith.constant 1 : index
    %c9_101 = arith.constant 9 : index
    %c127_102 = arith.constant 127 : index
    %115 = vector.load %arg3[%c1_100, %c9_101, %c127_102] : memref<2x25x257xf32, #tpu.memory_space<vmem>>, vector<1x16x128xf32>
    %116 = vector.shape_cast %115 : vector<1x16x128xf32> to vector<16x128xf32>
    %117 = arith.addf %114, %116 : vector<16x128xf32>
    %c1_103 = arith.constant 1 : index
    %c9_104 = arith.constant 9 : index
    %c129_105 = arith.constant 129 : index
    %118 = vector.load %arg3[%c1_103, %c9_104, %c129_105] : memref<2x25x257xf32, #tpu.memory_space<vmem>>, vector<1x16x128xf32>
    %119 = vector.shape_cast %118 : vector<1x16x128xf32> to vector<16x128xf32>
    %120 = arith.addf %117, %119 : vector<16x128xf32>
    %cst_106 = arith.constant 3.000000e+00 : f32
    %121 = vector.broadcast %cst_106 : f32 to vector<16x128xf32>
    %122 = arith.mulf %121, %109 : vector<16x128xf32>
    %123 = arith.subf %122, %120 : vector<16x128xf32>
    %cst_107 = arith.constant 8.000000e+00 : f32
    %124 = vector.broadcast %cst_107 : f32 to vector<16x128xf32>
    %125 = arith.mulf %124, %98 : vector<16x128xf32>
    %126 = arith.subf %123, %125 : vector<16x128xf32>
    %c1_108 = arith.constant 1 : index
    %c0_109 = arith.constant 0 : index
    %c0_110 = arith.constant 0 : index
    %127 = vector.load %arg2[%c1_108, %c0_109, %c0_110] : memref<3x16x128xf32, #tpu.memory_space<vmem>>, vector<1x16x128xf32>
    %128 = vector.shape_cast %127 : vector<1x16x128xf32> to vector<16x128xf32>
    %129 = vector.shape_cast %126 : vector<16x128xf32> to vector<1x16x128xf32>
    tpu.vector_store %arg2[%c1_108, %c0_109, %c0_110], %129 {strides = array<i32>} : memref<3x16x128xf32, #tpu.memory_space<vmem>>, vector<1x16x128xf32>,
    %c2_i32_111 = arith.constant 2 : i32
    %130 = arith.addi %0, %c2_i32_111 : i32
    %c0_i32_112 = arith.constant 0 : i32
    %c0_i32_113 = arith.constant 0 : i32
    %c0_i32_114 = arith.constant 0 : i32
    %c0_i32_115 = arith.constant 0 : i32
    %131 = tpu.memref_slice %arg1[%130, %c0_i32_114, %c0_i32_115] : memref<6x16x128xf32, #tpu.memory_space<any>> -> memref<1x16x128xf32, #tpu.memory_space<any>>
    %132 = tpu.memref_squeeze %131 : memref<1x16x128xf32, #tpu.memory_space<any>> -> memref<16x128xf32, #tpu.memory_space<any>>
    %c8_i32_116 = arith.constant 8 : i32
    %c128_i32_117 = arith.constant 128 : i32
    %133 = tpu.memref_slice %arg3[%c0_i32_112, %c8_i32_116, %c128_i32_117] : memref<2x25x257xf32, #tpu.memory_space<vmem>> -> memref<1x16x128xf32, #tpu.memory_space<vmem>>
    %134 = tpu.memref_squeeze %133 : memref<1x16x128xf32, #tpu.memory_space<vmem>> -> memref<16x128xf32, #tpu.memory_space<vmem>>
    %135 = tpu.memref_slice %arg4[%c0_i32_113] : memref<2x!tpu.dma_semaphore, #tpu.memory_space<semaphore_mem>> -> memref<1x!tpu.dma_semaphore, #tpu.memory_space<semaphore_mem>>
    %136 = tpu.memref_squeeze %135 : memref<1x!tpu.dma_semaphore, #tpu.memory_space<semaphore_mem>> -> memref<!tpu.dma_semaphore, #tpu.memory_space<semaphore_mem>>
    tpu.wait_dma2 semaphore(%136 : memref<!tpu.dma_semaphore, #tpu.memory_space<semaphore_mem>>) src(%132 : memref<16x128xf32, #tpu.memory_space<any>>) dst(%134 : memref<16x128xf32, #tpu.memory_space<vmem>>)
    %c0_118 = arith.constant 0 : index
    %c8_119 = arith.constant 8 : index
    %c128_120 = arith.constant 128 : index
    %137 = vector.load %arg3[%c0_118, %c8_119, %c128_120] : memref<2x25x257xf32, #tpu.memory_space<vmem>>, vector<1x16x128xf32>
    %138 = vector.shape_cast %137 : vector<1x16x128xf32> to vector<16x128xf32>
    %c0_121 = arith.constant 0 : index
    %c7_122 = arith.constant 7 : index
    %c128_123 = arith.constant 128 : index
    %139 = vector.load %arg3[%c0_121, %c7_122, %c128_123] : memref<2x25x257xf32, #tpu.memory_space<vmem>>, vector<1x16x128xf32>
    %140 = vector.shape_cast %139 : vector<1x16x128xf32> to vector<16x128xf32>
    %c0_124 = arith.constant 0 : index
    %c9_125 = arith.constant 9 : index
    %c128_126 = arith.constant 128 : index
    %141 = vector.load %arg3[%c0_124, %c9_125, %c128_126] : memref<2x25x257xf32, #tpu.memory_space<vmem>>, vector<1x16x128xf32>
    %142 = vector.shape_cast %141 : vector<1x16x128xf32> to vector<16x128xf32>
    %143 = arith.addf %140, %142 : vector<16x128xf32>
    %c0_127 = arith.constant 0 : index
    %c8_128 = arith.constant 8 : index
    %c127_129 = arith.constant 127 : index
    %144 = vector.load %arg3[%c0_127, %c8_128, %c127_129] : memref<2x25x257xf32, #tpu.memory_space<vmem>>, vector<1x16x128xf32>
    %145 = vector.shape_cast %144 : vector<1x16x128xf32> to vector<16x128xf32>
    %146 = arith.addf %143, %145 : vector<16x128xf32>
    %c0_130 = arith.constant 0 : index
    %c8_131 = arith.constant 8 : index
    %c129_132 = arith.constant 129 : index
    %147 = vector.load %arg3[%c0_130, %c8_131, %c129_132] : memref<2x25x257xf32, #tpu.memory_space<vmem>>, vector<1x16x128xf32>
    %148 = vector.shape_cast %147 : vector<1x16x128xf32> to vector<16x128xf32>
    %149 = arith.addf %146, %148 : vector<16x128xf32>
    %c0_133 = arith.constant 0 : index
    %c7_134 = arith.constant 7 : index
    %c127_135 = arith.constant 127 : index
    %150 = vector.load %arg3[%c0_133, %c7_134, %c127_135] : memref<2x25x257xf32, #tpu.memory_space<vmem>>, vector<1x16x128xf32>
    %151 = vector.shape_cast %150 : vector<1x16x128xf32> to vector<16x128xf32>
    %c0_136 = arith.constant 0 : index
    %c7_137 = arith.constant 7 : index
    %c129_138 = arith.constant 129 : index
    %152 = vector.load %arg3[%c0_136, %c7_137, %c129_138] : memref<2x25x257xf32, #tpu.memory_space<vmem>>, vector<1x16x128xf32>
    %153 = vector.shape_cast %152 : vector<1x16x128xf32> to vector<16x128xf32>
    %154 = arith.addf %151, %153 : vector<16x128xf32>
    %c0_139 = arith.constant 0 : index
    %c9_140 = arith.constant 9 : index
    %c127_141 = arith.constant 127 : index
    %155 = vector.load %arg3[%c0_139, %c9_140, %c127_141] : memref<2x25x257xf32, #tpu.memory_space<vmem>>, vector<1x16x128xf32>
    %156 = vector.shape_cast %155 : vector<1x16x128xf32> to vector<16x128xf32>
    %157 = arith.addf %154, %156 : vector<16x128xf32>
    %c0_142 = arith.constant 0 : index
    %c9_143 = arith.constant 9 : index
    %c129_144 = arith.constant 129 : index
    %158 = vector.load %arg3[%c0_142, %c9_143, %c129_144] : memref<2x25x257xf32, #tpu.memory_space<vmem>>, vector<1x16x128xf32>
    %159 = vector.shape_cast %158 : vector<1x16x128xf32> to vector<16x128xf32>
    %160 = arith.addf %157, %159 : vector<16x128xf32>
    %cst_145 = arith.constant 3.000000e+00 : f32
    %161 = vector.broadcast %cst_145 : f32 to vector<16x128xf32>
    %162 = arith.mulf %161, %149 : vector<16x128xf32>
    %163 = arith.subf %162, %160 : vector<16x128xf32>
    %cst_146 = arith.constant 8.000000e+00 : f32
    %164 = vector.broadcast %cst_146 : f32 to vector<16x128xf32>
    %165 = arith.mulf %164, %138 : vector<16x128xf32>
    %166 = arith.subf %163, %165 : vector<16x128xf32>
    %c2 = arith.constant 2 : index
    %c0_147 = arith.constant 0 : index
    %c0_148 = arith.constant 0 : index
    %167 = vector.load %arg2[%c2, %c0_147, %c0_148] : memref<3x16x128xf32, #tpu.memory_space<vmem>>, vector<1x16x128xf32>
    %168 = vector.shape_cast %167 : vector<1x16x128xf32> to vector<16x128xf32>
    %169 = vector.shape_cast %166 : vector<16x128xf32> to vector<1x16x128xf32>
    tpu.vector_store %arg2[%c2, %c0_147, %c0_148], %169 {strides = array<i32>} : memref<3x16x128xf32, #tpu.memory_space<vmem>>, vector<1x16x128xf32>,
    return
  }
  func.func @transform_1(%arg0: i32) -> (i32, i32, i32) {
    %c0_i32 = arith.constant 0 : i32
    %c0_i32_0 = arith.constant 0 : i32
    %c0_i32_1 = arith.constant 0 : i32
    return %arg0, %c0_i32, %c0_i32_0 : i32, i32, i32
  }
}

</mosaic_0001>

<llo_original>
// kernel: srm_conv.1
$region0: #{srm_conv.1}
  #allocation0 [shape = 'u32[]', space=smem, size = 0x4, offset = 0x4, fixed_abs, tag = 'smem constant byte address 0x4 - core index']
  #allocation1 [shape = 'u32[144,128]{1,0:T(1,128)}', space=vmem, size = 0x12000, scoped, tag = 'internal scratch']
  #allocation2 [shape = 'f32[2,25,257]{2,1,0:T(8,128)}', space=vmem, size = 0x18000, scoped, tag = 'scratch operand']
  #allocation3 [shape = 's32[2]{0}', space=sflag, size = 0x8, scoped, tag = 'scratch operand']
  #allocation6 [shape = 's32[]', space=sflag, size = 0x4, offset = 0, fixed_abs, tag = 'sflag constant byte address 0x0 - dummy sync flag']
  #allocation7 [shape = 's32[]', space=sflag, size = 0x4, offset = 0, fixed_abs, tag = 'sflag constant byte address 0x0 - dummy sync flag']
  #allocation8 [shape = 's32[]', space=sflag, size = 0x4, offset = 0, fixed_abs, tag = 'sflag constant byte address 0x0 - dummy sync flag']
  %s0 = inlined_call_operand.vmem [shape: f32[6,16,128], index: 0, kind: input, shape index: {}]
  %s1 = inlined_call_operand.hbm [shape: f32[6,16,128], index: 1, kind: output, shape index: {}]
  %s2 = sld [smem:[#allocation0]]
  $region127: #{srm_conv.1} parent=0
    _
  %s4 = ssub.s32 1, %s2
  %s5 = scalar_select 0, %s4, %s2
  $region1: #{srm_conv.1} parent=0
    #allocation4 [shape = 'u8[49152]{0}', space=vmem, size = 0xc000, scoped, tag = 'output window, operand 0']
    #allocation5 [shape = 's32[2]{0}', space=sflag, size = 0x8, scoped, tag = 'scoped memory for srm_conv.1']
    %6 = vsyncpa [#allocation5], 0
    %s7 = scalar_lea.sflag [#allocation5], 1
    %8 = vsyncpa %s7, 0
    loop: start=0, step=1, limit=3
    $region2: #{srm_conv.1} parent=1 // loop_pre_header
      _
    $region3: #{srm_conv.1} parent=1 // loop_header
      %s10 = sphi 0, %s14
      %p11 = scmp.ge.s32.totalorder %s10, 3
      %s19 = sphi 0, %s21
      %s22 = sphi 0, %s19
      %s32 = sphi 0, %s22
    $region4: #{srm_conv.1} parent=1 // loop_header_branch
      %13 = sbr.rel (%p11) target = $region8
    $region5: #{srm_conv.1} parent=1 // loop_body
      %s15 = ssub.s32 %s10, 1
      %s16 = sadd.s32 %s10, 1
      %s17 = ssub.s32 %s10, %s16
      %p18 = scmp.eq.s32.totalorder %s17, 0
      %s20 = sadd.s32 %s19, 1
      %s21 = scalar_select %p18, %s19, %s20
      %p23 = pneg %p18
      %p24 = scmp.eq.s32.totalorder %s10, 1
      %p25 = por %p23, %p24
      %p26 = scmp.ne.s32.totalorder %s19, %s22
      %p27 = scmp.eq.s32.totalorder %s10, 0
      %p28 = por %p26, %p27
      %p29 = scmp.ne.s32.totalorder %s19, %s22
      %p30 = scmp.eq.s32.totalorder %s15, 1
      %p31 = por %p29, %p30
      %p33 = scmp.ne.s32.totalorder %s22, %s32
      %p34 = scmp.eq.s32.totalorder %s15, 0
      %p35 = por %p33, %p34
      %p36 = scmp.lt.s32.totalorder %s10, 2
      // Predicated region
      $region9: #{srm_conv.1} parent=5 // pred_check
        %p37 = pneg %p36
      $region10: #{srm_conv.1} parent=5 // pred_check_branch
        %39 = sbr.rel (%p37) target = $region12
      $region11: #{srm_conv.1} parent=5 // pred_region
        %p40 = pneg %p28
        %p41 = pneg %p25
        %s42 = sand.u32 %s19, 1
        %s43 = scalar_lea.sflag [#allocation5], %s42
        %s44 = sand.u32 %s19, 1
        %s45 = smul.addr %s44, 48
        %s46 = scalar_lea.vmem [#allocation4], %s45
        %s47 = smul.u32 3, %s10
        %s48 = smul.u32 %s10, 3
        %v49 = vlaneseq
        %vm50 = vcmp.ge.s32.totalorder %v49, 127
        %vm51 = vcmp.lt.s32.totalorder %v49, 257
        %vm52 = vmand %vm50, %vm51
        %s53 = scalar_lea.vmem [#allocation2], 7
        %54 = vst.msk [vmem:[%s53] ss:$8 sm:$0x7] %vm52, 0.0
        %55 = vst.msk [vmem:[%s53] ss:$8 sm:$0x0] %vm52, 0.0
        %s56 = scalar_lea.vmem [#allocation2], 72
        %57 = vst.msk [vmem:[%s56] ss:$8 sm:$0x7] %vm52, 0.0
        %58 = vst.msk [vmem:[%s56] ss:$8 sm:$0x0] %vm52, 0.0
        %vm59 = vcmask 1048568
        %60 = vst.msk [vmem:[#allocation2 + $0x18] sm:$0xff] %vm59, 0.0
        %61 = vst.msk [vmem:[#allocation2 + $0x30] sm:$0xff] %vm59, 0.0
        %vm62 = vcmask 7168
        %63 = vst.msk [vmem:[#allocation2 + $0x28] sm:$0xff] %vm62, 0.0
        %64 = vst.msk [vmem:[#allocation2 + $0x40] sm:$0xff] %vm62, 0.0
        %s65 = scalar_lea.vmem [#allocation2], 96
        %s66 = scalar_lea.vmem %s65, 7 [#allocation2]
        %67 = vst.msk [vmem:[%s66] ss:$8 sm:$0x7] %vm52, 0.0
        %68 = vst.msk [vmem:[%s66] ss:$8 sm:$0x0] %vm52, 0.0
        %s69 = scalar_lea.vmem %s65, 72 [#allocation2]
        %70 = vst.msk [vmem:[%s69] ss:$8 sm:$0x7] %vm52, 0.0
        %71 = vst.msk [vmem:[%s69] ss:$8 sm:$0x0] %vm52, 0.0
        %72 = vst.msk [vmem:[%s65 + $0x18] sm:$0xff] %vm59, 0.0
        %73 = vst.msk [vmem:[%s65 + $0x30] sm:$0xff] %vm59, 0.0
        %74 = vst.msk [vmem:[%s65 + $0x28] sm:$0xff] %vm62, 0.0
        %75 = vst.msk [vmem:[%s65 + $0x40] sm:$0xff] %vm62, 0.0
        %s76 = smul.u32 %s48, 16
        %s77 = scalar_lea.vmem %s0, %s76
        %s78 = scalar_lea.vmem [#allocation2], 32
        %p80 = scmp.lt.u32.totalorder 8, 8
        %p81 = pneg %p80
        // Predicated region
        $region13: #{srm_conv.1} parent=11 // pred_check
          _
        $region14: #{srm_conv.1} parent=11 // pred_check_branch
          %83 = sbr.rel (%p80) target = $region16
        $region15: #{srm_conv.1} parent=11 // pred_region
          %s100 = sand.u32 8, 7
          %p101 = scmp.eq.s32.totalorder %s100, 0
          // Predicated region
          $region28: #{srm_conv.1} parent=15 // pred_check
            %p102 = pneg %p101
          $region29: #{srm_conv.1} parent=15 // pred_check_branch
            %104 = sbr.rel (%p102) target = $region31
          $region30: #{srm_conv.1} parent=15 // pred_region
            loop: start=0, step=1, limit=1
            $region32: #{srm_conv.1} parent=30 // loop_pre_header
              _
            $region33: #{srm_conv.1} parent=30 // loop_header
              %s106 = sphi 0, %s110
              %p107 = scmp.ge.s32.totalorder %s106, 1
              %s111 = sphi %s77, %s77
              %s112 = sphi %s78, %s78
            $region34: #{srm_conv.1} parent=30 // loop_header_branch
              %109 = sbr.rel (%p107) target = $region38
            $region35: #{srm_conv.1} parent=30 // loop_body
              %v113 = vld [vmem:[%s111] sm:$0xff]
              %114 = vst [vmem:[%s112] sm:$0xff] %v113
              %v115 = vld [vmem:[%s111 + $0x8] sm:$0xff]
              %116 = vst [vmem:[%s112 + $0x18] sm:$0xff] %v115
            $region36: #{srm_conv.1} parent=30 // loop_footer
              %s110 = sadd.s32 1, %s106
            $region37: #{srm_conv.1} parent=30 // loop_footer_branch
              %105 = sbr.rel target = $region33
            $region38: #{srm_conv.1} parent=30 // loop_exit
              _
          $region31: #{srm_conv.1} parent=15 // pred_fallthru
            _
          %p117 = pneg %p101
          // Predicated region
          $region39: #{srm_conv.1} parent=15 // pred_check
            _
          $region40: #{srm_conv.1} parent=15 // pred_check_branch
            %119 = sbr.rel (%p101) target = $region42
          $region41: #{srm_conv.1} parent=15 // pred_region
            %s120 = sand.u32 8, 7
          $region42: #{srm_conv.1} parent=15 // pred_fallthru
            _
        $region16: #{srm_conv.1} parent=11 // pred_fallthru
          _
        // Predicated region
        $region17: #{srm_conv.1} parent=11 // pred_check
          %p84 = pneg %p80
        $region18: #{srm_conv.1} parent=11 // pred_check_branch
          %86 = sbr.rel (%p84) target = $region20
        $region19: #{srm_conv.1} parent=11 // pred_region
          %s87 = sshllo.u32 0, 8
          loop: start=0, step=1, limit=1
          $region21: #{srm_conv.1} parent=19 // loop_pre_header
            _
          $region22: #{srm_conv.1} parent=19 // loop_header
            %s89 = sphi 0, %s93
            %p90 = scmp.ge.s32.totalorder %s89, 1
            %s94 = sphi %s77, %s77
            %s95 = sphi %s78, %s78
          $region23: #{srm_conv.1} parent=19 // loop_header_branch
            %92 = sbr.rel (%p90) target = $region27
          $region24: #{srm_conv.1} parent=19 // loop_body
            %v96 = vld [vmem:[%s94] sm:%s87]
            %97 = vst [vmem:[%s95] sm:%s87] %v96
            %v98 = vld [vmem:[%s94 + $0x8] sm:%s87]
            %99 = vst [vmem:[%s95 + $0x18] sm:%s87] %v98
          $region25: #{srm_conv.1} parent=19 // loop_footer
            %s93 = sadd.s32 1, %s89
          $region26: #{srm_conv.1} parent=19 // loop_footer_branch
            %88 = sbr.rel target = $region22
          $region27: #{srm_conv.1} parent=19 // loop_exit
            _
        $region20: #{srm_conv.1} parent=11 // pred_fallthru
          _
        // Predicated region
        $region43: #{srm_conv.1} parent=11 // pred_check
          _
        $region44: #{srm_conv.1} parent=11 // pred_check_branch
          %123 = sbr.rel (0) target = $region46
        $region45: #{srm_conv.1} parent=11 // pred_region
          %124 = vsyncadd [#allocation3], 256
        $region46: #{srm_conv.1} parent=11 // pred_fallthru
          _
        %s125 = smul.u32 8, 2
        %s126 = smul.u32 %s125, 1
        %s127 = sshll.u32 %s126, 4
        %128 = dma.done [#allocation3], %s127
        %s129 = sadd.s32 %s48, 1
        %s130 = smul.u32 %s129, 16
        %s131 = scalar_lea.vmem %s0, %s130
        %s132 = scalar_lea.vmem [#allocation2], 128
        %s133 = scalar_lea.sflag [#allocation3], 1
        %p135 = scmp.lt.u32.totalorder 8, 8
        %p136 = pneg %p135
        // Predicated region
        $region47: #{srm_conv.1} parent=11 // pred_check
          _
        $region48: #{srm_conv.1} parent=11 // pred_check_branch
          %138 = sbr.rel (%p135) target = $region50
        $region49: #{srm_conv.1} parent=11 // pred_region
          %s155 = sand.u32 8, 7
          %p156 = scmp.eq.s32.totalorder %s155, 0
          // Predicated region
          $region62: #{srm_conv.1} parent=49 // pred_check
            %p157 = pneg %p156
          $region63: #{srm_conv.1} parent=49 // pred_check_branch
            %159 = sbr.rel (%p157) target = $region65
          $region64: #{srm_conv.1} parent=49 // pred_region
            loop: start=0, step=1, limit=1
            $region66: #{srm_conv.1} parent=64 // loop_pre_header
              _
            $region67: #{srm_conv.1} parent=64 // loop_header
              %s161 = sphi 0, %s165
              %p162 = scmp.ge.s32.totalorder %s161, 1
              %s166 = sphi %s131, %s131
              %s167 = sphi %s132, %s132
            $region68: #{srm_conv.1} parent=64 // loop_header_branch
              %164 = sbr.rel (%p162) target = $region72
            $region69: #{srm_conv.1} parent=64 // loop_body
              %v168 = vld [vmem:[%s166] sm:$0xff]
              %169 = vst [vmem:[%s167] sm:$0xff] %v168
              %v170 = vld [vmem:[%s166 + $0x8] sm:$0xff]
              %171 = vst [vmem:[%s167 + $0x18] sm:$0xff] %v170
            $region70: #{srm_conv.1} parent=64 // loop_footer
              %s165 = sadd.s32 1, %s161
            $region71: #{srm_conv.1} parent=64 // loop_footer_branch
              %160 = sbr.rel target = $region67
            $region72: #{srm_conv.1} parent=64 // loop_exit
              _
          $region65: #{srm_conv.1} parent=49 // pred_fallthru
            _
          %p172 = pneg %p156
          // Predicated region
          $region73: #{srm_conv.1} parent=49 // pred_check
            _
          $region74: #{srm_conv.1} parent=49 // pred_check_branch
            %174 = sbr.rel (%p156) target = $region76
          $region75: #{srm_conv.1} parent=49 // pred_region
            %s175 = sand.u32 8, 7
          $region76: #{srm_conv.1} parent=49 // pred_fallthru
            _
        $region50: #{srm_conv.1} parent=11 // pred_fallthru
          _
        // Predicated region
        $region51: #{srm_conv.1} parent=11 // pred_check
          %p139 = pneg %p135
        $region52: #{srm_conv.1} parent=11 // pred_check_branch
          %141 = sbr.rel (%p139) target = $region54
        $region53: #{srm_conv.1} parent=11 // pred_region
          %s142 = sshllo.u32 0, 8
          loop: start=0, step=1, limit=1
          $region55: #{srm_conv.1} parent=53 // loop_pre_header
            _
          $region56: #{srm_conv.1} parent=53 // loop_header
            %s144 = sphi 0, %s148
            %p145 = scmp.ge.s32.totalorder %s144, 1
            %s149 = sphi %s131, %s131
            %s150 = sphi %s132, %s132
          $region57: #{srm_conv.1} parent=53 // loop_header_branch
            %147 = sbr.rel (%p145) target = $region61
          $region58: #{srm_conv.1} parent=53 // loop_body
            %v151 = vld [vmem:[%s149] sm:%s142]
            %152 = vst [vmem:[%s150] sm:%s142] %v151
            %v153 = vld [vmem:[%s149 + $0x8] sm:%s142]
            %154 = vst [vmem:[%s150 + $0x18] sm:%s142] %v153
          $region59: #{srm_conv.1} parent=53 // loop_footer
            %s148 = sadd.s32 1, %s144
          $region60: #{srm_conv.1} parent=53 // loop_footer_branch
            %143 = sbr.rel target = $region56
          $region61: #{srm_conv.1} parent=53 // loop_exit
            _
        $region54: #{srm_conv.1} parent=11 // pred_fallthru
          _
        // Predicated region
        $region77: #{srm_conv.1} parent=11 // pred_check
          _
        $region78: #{srm_conv.1} parent=11 // pred_check_branch
          %178 = sbr.rel (0) target = $region80
        $region79: #{srm_conv.1} parent=11 // pred_region
          %179 = vsyncadd %s133, 256
        $region80: #{srm_conv.1} parent=11 // pred_fallthru
          _
        %v180 = vld [vmem:[#allocation2 + $0x20] sm:$0xff]
        %v181 = vld [vmem:[#allocation2 + $0x38] sm:$0xff]
        %v182 = vld [vmem:[#allocation2 + $0x8] sm:$0x80]
        %v183 = vld [vmem:[#allocation2 + $0x38] sm:$0x7f]
        %v184 = vld [vmem:[#allocation2 + $0x20] sm:$0xfe]
        %v185 = vld [vmem:[#allocation2 + $0x50] sm:$0x1]
        %vm189 = vcmask 1045504
        %v190 = vrot.slane %v184, 2
        %v191 = vrot.slane %v181, 2
        %v192 = vsel %vm189, %v190, %v191
        %v193 = vrot.slane %v185, 2
        %v194 = vsel %vm189, %v191, %v193
        %v198 = vadd.f32 %v182, %v190
        %v199 = vadd.f32 %v180, %v192
        %v200 = vadd.f32 %v183, %v194
        %v201 = vld [vmem:[#allocation2 + $0x18] sm:$0xff]
        %v202 = vld [vmem:[#allocation2 + $0x30] sm:$0xff]
        %vm206 = vcmask 1046528
        %v207 = vrot.slane %v201, 1
        %v208 = vrot.slane %v180, 1
        %v209 = vrot.slane %v202, 1
        %v210 = vsel %vm206, %v207, %v209
        %v211 = vrot.slane %v181, 1
        %v212 = vsel %vm206, %v208, %v211
        %213 = vrot.lane.b32.xlu0 %v207, 1
        %v214 = vpop.permute.xlu0 %213
        %215 = vrot.lane.b32.xlu0 %v208, 1
        %v216 = vpop.permute.xlu0 %215
        %217 = vrot.lane.b32.xlu0 %v210, 1
        %v218 = vpop.permute.xlu0 %217
        %219 = vrot.lane.b32.xlu0 %v212, 1
        %v220 = vpop.permute.xlu0 %219
        %221 = vrot.lane.b32.xlu0 %v209, 1
        %v222 = vpop.permute.xlu0 %221
        %223 = vrot.lane.b32.xlu0 %v211, 1
        %v224 = vpop.permute.xlu0 %223
        %v225 = vsel %vm62, %v214, %v216
        %v226 = vsel %vm62, %v218, %v220
        %v227 = vsel %vm62, %v222, %v224
        %v231 = vadd.f32 %v198, %v225
        %v232 = vadd.f32 %v199, %v226
        %v233 = vadd.f32 %v200, %v227
        %v234 = vld [vmem:[#allocation2 + $0x28] sm:$0xff]
        %v235 = vld [vmem:[#allocation2 + $0x40] sm:$0xff]
        %v238 = vrot.slane %v234, 1
        %v239 = vrot.slane %v235, 1
        %v240 = vsel %vm206, %v238, %v239
        %241 = vrot.lane.b32.xlu0 %v208, 127
        %v242 = vpop.permute.xlu0 %241
        %243 = vrot.lane.b32.xlu0 %v238, 127
        %v244 = vpop.permute.xlu0 %243
        %245 = vrot.lane.b32.xlu0 %v212, 127
        %v246 = vpop.permute.xlu0 %245
        %247 = vrot.lane.b32.xlu0 %v240, 127
        %v248 = vpop.permute.xlu0 %247
        %249 = vrot.lane.b32.xlu0 %v211, 127
        %v250 = vpop.permute.xlu0 %249
        %251 = vrot.lane.b32.xlu0 %v239, 127
        %v252 = vpop.permute.xlu0 %251
        %vm253 = vcmask 1039360
        %v254 = vsel %vm253, %v242, %v244
        %v255 = vsel %vm253, %v246, %v248
        %v256 = vsel %vm253, %v250, %v252
        %v260 = vadd.f32 %v231, %v254
        %v261 = vadd.f32 %v232, %v255
        %v262 = vadd.f32 %v233, %v256
        %v263 = vld [vmem:[#allocation2] sm:$0x80]
        %v264 = vld [vmem:[#allocation2 + $0x30] sm:$0x7f]
        %v265 = vld [vmem:[#allocation2 + $0x10] sm:$0x80]
        %v266 = vld [vmem:[#allocation2 + $0x40] sm:$0x7f]
        %271 = vrot.lane.b32.xlu0 %v182, 126
        %v272 = vpop.permute.xlu0 %271
        %273 = vrot.lane.b32.xlu0 %v265, 126
        %v274 = vpop.permute.xlu0 %273
        %275 = vrot.lane.b32.xlu0 %v180, 126
        %v276 = vpop.permute.xlu0 %275
        %277 = vrot.lane.b32.xlu0 %v234, 126
        %v278 = vpop.permute.xlu0 %277
        %279 = vrot.lane.b32.xlu0 %v183, 126
        %v280 = vpop.permute.xlu0 %279
        %281 = vrot.lane.b32.xlu0 %v266, 126
        %v282 = vpop.permute.xlu0 %281
        %vm283 = vcmask 1031168
        %v284 = vsel %vm283, %v272, %v274
        %v285 = vsel %vm283, %v276, %v278
        %v286 = vsel %vm283, %v280, %v282
        %v293 = vadd.f32 %v263, %v272
        %v294 = vadd.f32 %v182, %v284
        %v295 = vadd.f32 %v201, %v276
        %v296 = vadd.f32 %v180, %v285
        %v297 = vadd.f32 %v264, %v280
        %v298 = vadd.f32 %v183, %v286
        %v299 = vld [vmem:[#allocation2 + $0x18] sm:$0xfe]
        %v300 = vld [vmem:[#allocation2 + $0x48] sm:$0x1]
        %v303 = vrot.slane %v299, 2
        %v304 = vrot.slane %v202, 2
        %v305 = vsel %vm189, %v303, %v304
        %v306 = vrot.slane %v300, 2
        %v307 = vsel %vm189, %v304, %v306
        %v311 = vadd.f32 %v293, %v303
        %v312 = vadd.f32 %v294, %v190
        %v313 = vadd.f32 %v295, %v305
        %v314 = vadd.f32 %v296, %v192
        %v315 = vadd.f32 %v297, %v307
        %v316 = vadd.f32 %v298, %v194
        %v317 = vld [vmem:[#allocation2 + $0x28] sm:$0xfe]
        %v318 = vld [vmem:[#allocation2 + $0x58] sm:$0x1]
        %v321 = vrot.slane %v317, 2
        %v322 = vrot.slane %v235, 2
        %v323 = vsel %vm189, %v321, %v322
        %v324 = vrot.slane %v318, 2
        %v325 = vsel %vm189, %v322, %v324
        %326 = vrot.lane.b32.xlu0 %v190, 126
        %v327 = vpop.permute.xlu0 %326
        %328 = vrot.lane.b32.xlu0 %v321, 126
        %v329 = vpop.permute.xlu0 %328
        %330 = vrot.lane.b32.xlu0 %v192, 126
        %v331 = vpop.permute.xlu0 %330
        %332 = vrot.lane.b32.xlu0 %v323, 126
        %v333 = vpop.permute.xlu0 %332
        %334 = vrot.lane.b32.xlu0 %v194, 126
        %v335 = vpop.permute.xlu0 %334
        %336 = vrot.lane.b32.xlu0 %v325, 126
        %v337 = vpop.permute.xlu0 %336
        %v338 = vsel %vm283, %v327, %v329
        %v339 = vsel %vm283, %v331, %v333
        %v340 = vsel %vm283, %v335, %v337
        %v347 = vadd.f32 %v311, %v327
        %v348 = vadd.f32 %v312, %v338
        %v349 = vadd.f32 %v313, %v331
        %v350 = vadd.f32 %v314, %v339
        %v351 = vadd.f32 %v315, %v335
        %v352 = vadd.f32 %v316, %v340
        %v353 = vmul.f32 %v260, 3.0
        %v354 = vmul.f32 %v261, 3.0
        %v355 = vmul.f32 %v262, 3.0
        %362 = vrot.lane.b32.xlu0 %v347, 1
        %v363 = vpop.permute.xlu0 %362
        %364 = vrot.lane.b32.xlu0 %v348, 1
        %v365 = vpop.permute.xlu0 %364
        %366 = vrot.lane.b32.xlu0 %v349, 1
        %v367 = vpop.permute.xlu0 %366
        %368 = vrot.lane.b32.xlu0 %v350, 1
        %v369 = vpop.permute.xlu0 %368
        %370 = vrot.lane.b32.xlu0 %v351, 1
        %v371 = vpop.permute.xlu0 %370
        %372 = vrot.lane.b32.xlu0 %v352, 1
        %v373 = vpop.permute.xlu0 %372
        %v374 = vsel %vm62, %v363, %v365
        %v375 = vsel %vm62, %v367, %v369
        %v376 = vsel %vm62, %v371, %v373
        %v380 = vsub.f32 %v353, %v374
        %v381 = vsub.f32 %v354, %v375
        %v382 = vsub.f32 %v355, %v376
        %v383 = vmul.f32 %v180, 8.0
        %v384 = vmul.f32 %v181, 8.0
        %v387 = vrot.slane %v383, 1
        %v388 = vrot.slane %v384, 1
        %v389 = vsel %vm206, %v387, %v388
        %v393 = vsub.f32 %v380, %v387
        %v394 = vsub.f32 %v381, %v389
        %v395 = vsub.f32 %v382, %v388
        %396 = vst [vmem:[%s46 - $0x7] sm:$0x80] %v393
        %397 = vst [vmem:[%s46 + $0x1] sm:$0xff] %v394
        %398 = vst [vmem:[%s46 + $0x9] sm:$0x7f] %v395
        %s399 = sshll.u32 %s126, 4
        %400 = dma.done %s133, %s399
        %s401 = sadd.s32 %s48, 2
        %s402 = smul.u32 %s401, 16
        %s403 = scalar_lea.vmem %s0, %s402
        %p405 = scmp.lt.u32.totalorder 8, 8
        %p406 = pneg %p405
        // Predicated region
        $region81: #{srm_conv.1} parent=11 // pred_check
          _
        $region82: #{srm_conv.1} parent=11 // pred_check_branch
          %408 = sbr.rel (%p405) target = $region84
        $region83: #{srm_conv.1} parent=11 // pred_region
          %s425 = sand.u32 8, 7
          %p426 = scmp.eq.s32.totalorder %s425, 0
          // Predicated region
          $region96: #{srm_conv.1} parent=83 // pred_check
            %p427 = pneg %p426
          $region97: #{srm_conv.1} parent=83 // pred_check_branch
            %429 = sbr.rel (%p427) target = $region99
          $region98: #{srm_conv.1} parent=83 // pred_region
            loop: start=0, step=1, limit=1
            $region100: #{srm_conv.1} parent=98 // loop_pre_header
              _
            $region101: #{srm_conv.1} parent=98 // loop_header
              %s431 = sphi 0, %s435
              %p432 = scmp.ge.s32.totalorder %s431, 1
              %s436 = sphi %s403, %s403
              %s437 = sphi %s78, %s78
            $region102: #{srm_conv.1} parent=98 // loop_header_branch
              %434 = sbr.rel (%p432) target = $region106
            $region103: #{srm_conv.1} parent=98 // loop_body
              %v438 = vld [vmem:[%s436] sm:$0xff]
              %439 = vst [vmem:[%s437] sm:$0xff] %v438
              %v440 = vld [vmem:[%s436 + $0x8] sm:$0xff]
              %441 = vst [vmem:[%s437 + $0x18] sm:$0xff] %v440
            $region104: #{srm_conv.1} parent=98 // loop_footer
              %s435 = sadd.s32 1, %s431
            $region105: #{srm_conv.1} parent=98 // loop_footer_branch
              %430 = sbr.rel target = $region101
            $region106: #{srm_conv.1} parent=98 // loop_exit
              _
          $region99: #{srm_conv.1} parent=83 // pred_fallthru
            _
          %p442 = pneg %p426
          // Predicated region
          $region107: #{srm_conv.1} parent=83 // pred_check
            _
          $region108: #{srm_conv.1} parent=83 // pred_check_branch
            %444 = sbr.rel (%p426) target = $region110
          $region109: #{srm_conv.1} parent=83 // pred_region
            %s445 = sand.u32 8, 7
          $region110: #{srm_conv.1} parent=83 // pred_fallthru
            _
        $region84: #{srm_conv.1} parent=11 // pred_fallthru
          _
        // Predicated region
        $region85: #{srm_conv.1} parent=11 // pred_check
          %p409 = pneg %p405
        $region86: #{srm_conv.1} parent=11 // pred_check_branch
          %411 = sbr.rel (%p409) target = $region88
        $region87: #{srm_conv.1} parent=11 // pred_region
          %s412 = sshllo.u32 0, 8
          loop: start=0, step=1, limit=1
          $region89: #{srm_conv.1} parent=87 // loop_pre_header
            _
          $region90: #{srm_conv.1} parent=87 // loop_header
            %s414 = sphi 0, %s418
            %p415 = scmp.ge.s32.totalorder %s414, 1
            %s419 = sphi %s403, %s403
            %s420 = sphi %s78, %s78
          $region91: #{srm_conv.1} parent=87 // loop_header_branch
            %417 = sbr.rel (%p415) target = $region95
          $region92: #{srm_conv.1} parent=87 // loop_body
            %v421 = vld [vmem:[%s419] sm:%s412]
            %422 = vst [vmem:[%s420] sm:%s412] %v421
            %v423 = vld [vmem:[%s419 + $0x8] sm:%s412]
            %424 = vst [vmem:[%s420 + $0x18] sm:%s412] %v423
          $region93: #{srm_conv.1} parent=87 // loop_footer
            %s418 = sadd.s32 1, %s414
          $region94: #{srm_conv.1} parent=87 // loop_footer_branch
            %413 = sbr.rel target = $region90
          $region95: #{srm_conv.1} parent=87 // loop_exit
            _
        $region88: #{srm_conv.1} parent=11 // pred_fallthru
          _
        // Predicated region
        $region111: #{srm_conv.1} parent=11 // pred_check
          _
        $region112: #{srm_conv.1} parent=11 // pred_check_branch
          %448 = sbr.rel (0) target = $region114
        $region113: #{srm_conv.1} parent=11 // pred_region
          %449 = vsyncadd [#allocation3], 256
        $region114: #{srm_conv.1} parent=11 // pred_fallthru
          _
        %v450 = vld [vmem:[%s65 + $0x20] sm:$0xff]
        %v451 = vld [vmem:[%s65 + $0x38] sm:$0xff]
        %v452 = vld [vmem:[%s65 + $0x8] sm:$0x80]
        %v453 = vld [vmem:[%s65 + $0x38] sm:$0x7f]
        %v454 = vld [vmem:[%s65 + $0x20] sm:$0xfe]
        %v455 = vld [vmem:[%s65 + $0x50] sm:$0x1]
        %v459 = vrot.slane %v454, 2
        %v460 = vrot.slane %v451, 2
        %v461 = vsel %vm189, %v459, %v460
        %v462 = vrot.slane %v455, 2
        %v463 = vsel %vm189, %v460, %v462
        %v467 = vadd.f32 %v452, %v459
        %v468 = vadd.f32 %v450, %v461
        %v469 = vadd.f32 %v453, %v463
        %v470 = vld [vmem:[%s65 + $0x18] sm:$0xff]
        %v471 = vld [vmem:[%s65 + $0x30] sm:$0xff]
        %v475 = vrot.slane %v470, 1
        %v476 = vrot.slane %v450, 1
        %v477 = vrot.slane %v471, 1
        %v478 = vsel %vm206, %v475, %v477
        %v479 = vrot.slane %v451, 1
        %v480 = vsel %vm206, %v476, %v479
        %481 = vrot.lane.b32.xlu0 %v475, 1
        %v482 = vpop.permute.xlu0 %481
        %483 = vrot.lane.b32.xlu0 %v476, 1
        %v484 = vpop.permute.xlu0 %483
        %485 = vrot.lane.b32.xlu0 %v478, 1
        %v486 = vpop.permute.xlu0 %485
        %487 = vrot.lane.b32.xlu0 %v480, 1
        %v488 = vpop.permute.xlu0 %487
        %489 = vrot.lane.b32.xlu0 %v477, 1
        %v490 = vpop.permute.xlu0 %489
        %491 = vrot.lane.b32.xlu0 %v479, 1
        %v492 = vpop.permute.xlu0 %491
        %v493 = vsel %vm62, %v482, %v484
        %v494 = vsel %vm62, %v486, %v488
        %v495 = vsel %vm62, %v490, %v492
        %v499 = vadd.f32 %v467, %v493
        %v500 = vadd.f32 %v468, %v494
        %v501 = vadd.f32 %v469, %v495
        %v502 = vld [vmem:[%s65 + $0x28] sm:$0xff]
        %v503 = vld [vmem:[%s65 + $0x40] sm:$0xff]
        %v506 = vrot.slane %v502, 1
        %v507 = vrot.slane %v503, 1
        %v508 = vsel %vm206, %v506, %v507
        %509 = vrot.lane.b32.xlu0 %v476, 127
        %v510 = vpop.permute.xlu0 %509
        %511 = vrot.lane.b32.xlu0 %v506, 127
        %v512 = vpop.permute.xlu0 %511
        %513 = vrot.lane.b32.xlu0 %v480, 127
        %v514 = vpop.permute.xlu0 %513
        %515 = vrot.lane.b32.xlu0 %v508, 127
        %v516 = vpop.permute.xlu0 %515
        %517 = vrot.lane.b32.xlu0 %v479, 127
        %v518 = vpop.permute.xlu0 %517
        %519 = vrot.lane.b32.xlu0 %v507, 127
        %v520 = vpop.permute.xlu0 %519
        %v521 = vsel %vm253, %v510, %v512
        %v522 = vsel %vm253, %v514, %v516
        %v523 = vsel %vm253, %v518, %v520
        %v527 = vadd.f32 %v499, %v521
        %v528 = vadd.f32 %v500, %v522
        %v529 = vadd.f32 %v501, %v523
        %v530 = vld [vmem:[%s65] sm:$0x80]
        %v531 = vld [vmem:[%s65 + $0x30] sm:$0x7f]
        %v532 = vld [vmem:[%s65 + $0x10] sm:$0x80]
        %v533 = vld [vmem:[%s65 + $0x40] sm:$0x7f]
        %538 = vrot.lane.b32.xlu0 %v452, 126
        %v539 = vpop.permute.xlu0 %538
        %540 = vrot.lane.b32.xlu0 %v532, 126
        %v541 = vpop.permute.xlu0 %540
        %542 = vrot.lane.b32.xlu0 %v450, 126
        %v543 = vpop.permute.xlu0 %542
        %544 = vrot.lane.b32.xlu0 %v502, 126
        %v545 = vpop.permute.xlu0 %544
        %546 = vrot.lane.b32.xlu0 %v453, 126
        %v547 = vpop.permute.xlu0 %546
        %548 = vrot.lane.b32.xlu0 %v533, 126
        %v549 = vpop.permute.xlu0 %548
        %v550 = vsel %vm283, %v539, %v541
        %v551 = vsel %vm283, %v543, %v545
        %v552 = vsel %vm283, %v547, %v549
        %v559 = vadd.f32 %v530, %v539
        %v560 = vadd.f32 %v452, %v550
        %v561 = vadd.f32 %v470, %v543
        %v562 = vadd.f32 %v450, %v551
        %v563 = vadd.f32 %v531, %v547
        %v564 = vadd.f32 %v453, %v552
        %v565 = vld [vmem:[%s65 + $0x18] sm:$0xfe]
        %v566 = vld [vmem:[%s65 + $0x48] sm:$0x1]
        %v569 = vrot.slane %v565, 2
        %v570 = vrot.slane %v471, 2
        %v571 = vsel %vm189, %v569, %v570
        %v572 = vrot.slane %v566, 2
        %v573 = vsel %vm189, %v570, %v572
        %v577 = vadd.f32 %v559, %v569
        %v578 = vadd.f32 %v560, %v459
        %v579 = vadd.f32 %v561, %v571
        %v580 = vadd.f32 %v562, %v461
        %v581 = vadd.f32 %v563, %v573
        %v582 = vadd.f32 %v564, %v463
        %v583 = vld [vmem:[%s65 + $0x28] sm:$0xfe]
        %v584 = vld [vmem:[%s65 + $0x58] sm:$0x1]
        %v587 = vrot.slane %v583, 2
        %v588 = vrot.slane %v503, 2
        %v589 = vsel %vm189, %v587, %v588
        %v590 = vrot.slane %v584, 2
        %v591 = vsel %vm189, %v588, %v590
        %592 = vrot.lane.b32.xlu0 %v459, 126
        %v593 = vpop.permute.xlu0 %592
        %594 = vrot.lane.b32.xlu0 %v587, 126
        %v595 = vpop.permute.xlu0 %594
        %596 = vrot.lane.b32.xlu0 %v461, 126
        %v597 = vpop.permute.xlu0 %596
        %598 = vrot.lane.b32.xlu0 %v589, 126
        %v599 = vpop.permute.xlu0 %598
        %600 = vrot.lane.b32.xlu0 %v463, 126
        %v601 = vpop.permute.xlu0 %600
        %602 = vrot.lane.b32.xlu0 %v591, 126
        %v603 = vpop.permute.xlu0 %602
        %v604 = vsel %vm283, %v593, %v595
        %v605 = vsel %vm283, %v597, %v599
        %v606 = vsel %vm283, %v601, %v603
        %v613 = vadd.f32 %v577, %v593
        %v614 = vadd.f32 %v578, %v604
        %v615 = vadd.f32 %v579, %v597
        %v616 = vadd.f32 %v580, %v605
        %v617 = vadd.f32 %v581, %v601
        %v618 = vadd.f32 %v582, %v606
        %v619 = vmul.f32 %v527, 3.0
        %v620 = vmul.f32 %v528, 3.0
        %v621 = vmul.f32 %v529, 3.0
        %628 = vrot.lane.b32.xlu0 %v613, 1
        %v629 = vpop.permute.xlu0 %628
        %630 = vrot.lane.b32.xlu0 %v614, 1
        %v631 = vpop.permute.xlu0 %630
        %632 = vrot.lane.b32.xlu0 %v615, 1
        %v633 = vpop.permute.xlu0 %632
        %634 = vrot.lane.b32.xlu0 %v616, 1
        %v635 = vpop.permute.xlu0 %634
        %636 = vrot.lane.b32.xlu0 %v617, 1
        %v637 = vpop.permute.xlu0 %636
        %638 = vrot.lane.b32.xlu0 %v618, 1
        %v639 = vpop.permute.xlu0 %638
        %v640 = vsel %vm62, %v629, %v631
        %v641 = vsel %vm62, %v633, %v635
        %v642 = vsel %vm62, %v637, %v639
        %v646 = vsub.f32 %v619, %v640
        %v647 = vsub.f32 %v620, %v641
        %v648 = vsub.f32 %v621, %v642
        %v649 = vmul.f32 %v450, 8.0
        %v650 = vmul.f32 %v451, 8.0
        %v653 = vrot.slane %v649, 1
        %v654 = vrot.slane %v650, 1
        %v655 = vsel %vm206, %v653, %v654
        %v659 = vsub.f32 %v646, %v653
        %v660 = vsub.f32 %v647, %v655
        %v661 = vsub.f32 %v648, %v654
        %s662 = scalar_lea.vmem %s46, 16 [#allocation4]
        %663 = vst [vmem:[%s662 - $0x7] sm:$0x80] %v659
        %664 = vst [vmem:[%s662 + $0x1] sm:$0xff] %v660
        %665 = vst [vmem:[%s662 + $0x9] sm:$0x7f] %v661
        %s666 = sshll.u32 %s126, 4
        %667 = dma.done [#allocation3], %s666
        %v668 = vld [vmem:[#allocation2 + $0x20] sm:$0xff]
        %v669 = vld [vmem:[#allocation2 + $0x38] sm:$0xff]
        %v670 = vld [vmem:[#allocation2 + $0x8] sm:$0x80]
        %v671 = vld [vmem:[#allocation2 + $0x38] sm:$0x7f]
        %v672 = vld [vmem:[#allocation2 + $0x20] sm:$0xfe]
        %v673 = vld [vmem:[#allocation2 + $0x50] sm:$0x1]
        %v677 = vrot.slane %v672, 2
        %v678 = vrot.slane %v669, 2
        %v679 = vsel %vm189, %v677, %v678
        %v680 = vrot.slane %v673, 2
        %v681 = vsel %vm189, %v678, %v680
        %v685 = vadd.f32 %v670, %v677
        %v686 = vadd.f32 %v668, %v679
        %v687 = vadd.f32 %v671, %v681
        %v688 = vld [vmem:[#allocation2 + $0x18] sm:$0xff]
        %v689 = vld [vmem:[#allocation2 + $0x30] sm:$0xff]
        %v693 = vrot.slane %v688, 1
        %v694 = vrot.slane %v668, 1
        %v695 = vrot.slane %v689, 1
        %v696 = vsel %vm206, %v693, %v695
        %v697 = vrot.slane %v669, 1
        %v698 = vsel %vm206, %v694, %v697
        %699 = vrot.lane.b32.xlu0 %v693, 1
        %v700 = vpop.permute.xlu0 %699
        %701 = vrot.lane.b32.xlu0 %v694, 1
        %v702 = vpop.permute.xlu0 %701
        %703 = vrot.lane.b32.xlu0 %v696, 1
        %v704 = vpop.permute.xlu0 %703
        %705 = vrot.lane.b32.xlu0 %v698, 1
        %v706 = vpop.permute.xlu0 %705
        %707 = vrot.lane.b32.xlu0 %v695, 1
        %v708 = vpop.permute.xlu0 %707
        %709 = vrot.lane.b32.xlu0 %v697, 1
        %v710 = vpop.permute.xlu0 %709
        %v711 = vsel %vm62, %v700, %v702
        %v712 = vsel %vm62, %v704, %v706
        %v713 = vsel %vm62, %v708, %v710
        %v717 = vadd.f32 %v685, %v711
        %v718 = vadd.f32 %v686, %v712
        %v719 = vadd.f32 %v687, %v713
        %v720 = vld [vmem:[#allocation2 + $0x28] sm:$0xff]
        %v721 = vld [vmem:[#allocation2 + $0x40] sm:$0xff]
        %v724 = vrot.slane %v720, 1
        %v725 = vrot.slane %v721, 1
        %v726 = vsel %vm206, %v724, %v725
        %727 = vrot.lane.b32.xlu0 %v694, 127
        %v728 = vpop.permute.xlu0 %727
        %729 = vrot.lane.b32.xlu0 %v724, 127
        %v730 = vpop.permute.xlu0 %729
        %731 = vrot.lane.b32.xlu0 %v698, 127
        %v732 = vpop.permute.xlu0 %731
        %733 = vrot.lane.b32.xlu0 %v726, 127
        %v734 = vpop.permute.xlu0 %733
        %735 = vrot.lane.b32.xlu0 %v697, 127
        %v736 = vpop.permute.xlu0 %735
        %737 = vrot.lane.b32.xlu0 %v725, 127
        %v738 = vpop.permute.xlu0 %737
        %v739 = vsel %vm253, %v728, %v730
        %v740 = vsel %vm253, %v732, %v734
        %v741 = vsel %vm253, %v736, %v738
        %v745 = vadd.f32 %v717, %v739
        %v746 = vadd.f32 %v718, %v740
        %v747 = vadd.f32 %v719, %v741
        %v748 = vld [vmem:[#allocation2] sm:$0x80]
        %v749 = vld [vmem:[#allocation2 + $0x30] sm:$0x7f]
        %v750 = vld [vmem:[#allocation2 + $0x10] sm:$0x80]
        %v751 = vld [vmem:[#allocation2 + $0x40] sm:$0x7f]
        %756 = vrot.lane.b32.xlu0 %v670, 126
        %v757 = vpop.permute.xlu0 %756
        %758 = vrot.lane.b32.xlu0 %v750, 126
        %v759 = vpop.permute.xlu0 %758
        %760 = vrot.lane.b32.xlu0 %v668, 126
        %v761 = vpop.permute.xlu0 %760
        %762 = vrot.lane.b32.xlu0 %v720, 126
        %v763 = vpop.permute.xlu0 %762
        %764 = vrot.lane.b32.xlu0 %v671, 126
        %v765 = vpop.permute.xlu0 %764
        %766 = vrot.lane.b32.xlu0 %v751, 126
        %v767 = vpop.permute.xlu0 %766
        %v768 = vsel %vm283, %v757, %v759
        %v769 = vsel %vm283, %v761, %v763
        %v770 = vsel %vm283, %v765, %v767
        %v777 = vadd.f32 %v748, %v757
        %v778 = vadd.f32 %v670, %v768
        %v779 = vadd.f32 %v688, %v761
        %v780 = vadd.f32 %v668, %v769
        %v781 = vadd.f32 %v749, %v765
        %v782 = vadd.f32 %v671, %v770
        %v783 = vld [vmem:[#allocation2 + $0x18] sm:$0xfe]
        %v784 = vld [vmem:[#allocation2 + $0x48] sm:$0x1]
        %v787 = vrot.slane %v783, 2
        %v788 = vrot.slane %v689, 2
        %v789 = vsel %vm189, %v787, %v788
        %v790 = vrot.slane %v784, 2
        %v791 = vsel %vm189, %v788, %v790
        %v795 = vadd.f32 %v777, %v787
        %v796 = vadd.f32 %v778, %v677
        %v797 = vadd.f32 %v779, %v789
        %v798 = vadd.f32 %v780, %v679
        %v799 = vadd.f32 %v781, %v791
        %v800 = vadd.f32 %v782, %v681
        %v801 = vld [vmem:[#allocation2 + $0x28] sm:$0xfe]
        %v802 = vld [vmem:[#allocation2 + $0x58] sm:$0x1]
        %v805 = vrot.slane %v801, 2
        %v806 = vrot.slane %v721, 2
        %v807 = vsel %vm189, %v805, %v806
        %v808 = vrot.slane %v802, 2
        %v809 = vsel %vm189, %v806, %v808
        %810 = vrot.lane.b32.xlu0 %v677, 126
        %v811 = vpop.permute.xlu0 %810
        %812 = vrot.lane.b32.xlu0 %v805, 126
        %v813 = vpop.permute.xlu0 %812
        %814 = vrot.lane.b32.xlu0 %v679, 126
        %v815 = vpop.permute.xlu0 %814
        %816 = vrot.lane.b32.xlu0 %v807, 126
        %v817 = vpop.permute.xlu0 %816
        %818 = vrot.lane.b32.xlu0 %v681, 126
        %v819 = vpop.permute.xlu0 %818
        %820 = vrot.lane.b32.xlu0 %v809, 126
        %v821 = vpop.permute.xlu0 %820
        %v822 = vsel %vm283, %v811, %v813
        %v823 = vsel %vm283, %v815, %v817
        %v824 = vsel %vm283, %v819, %v821
        %v831 = vadd.f32 %v795, %v811
        %v832 = vadd.f32 %v796, %v822
        %v833 = vadd.f32 %v797, %v815
        %v834 = vadd.f32 %v798, %v823
        %v835 = vadd.f32 %v799, %v819
        %v836 = vadd.f32 %v800, %v824
        %v837 = vmul.f32 %v745, 3.0
        %v838 = vmul.f32 %v746, 3.0
        %v839 = vmul.f32 %v747, 3.0
        %846 = vrot.lane.b32.xlu0 %v831, 1
        %v847 = vpop.permute.xlu0 %846
        %848 = vrot.lane.b32.xlu0 %v832, 1
        %v849 = vpop.permute.xlu0 %848
        %850 = vrot.lane.b32.xlu0 %v833, 1
        %v851 = vpop.permute.xlu0 %850
        %852 = vrot.lane.b32.xlu0 %v834, 1
        %v853 = vpop.permute.xlu0 %852
        %854 = vrot.lane.b32.xlu0 %v835, 1
        %v855 = vpop.permute.xlu0 %854
        %856 = vrot.lane.b32.xlu0 %v836, 1
        %v857 = vpop.permute.xlu0 %856
        %v858 = vsel %vm62, %v847, %v849
        %v859 = vsel %vm62, %v851, %v853
        %v860 = vsel %vm62, %v855, %v857
        %v864 = vsub.f32 %v837, %v858
        %v865 = vsub.f32 %v838, %v859
        %v866 = vsub.f32 %v839, %v860
        %v867 = vmul.f32 %v668, 8.0
        %v868 = vmul.f32 %v669, 8.0
        %v871 = vrot.slane %v867, 1
        %v872 = vrot.slane %v868, 1
        %v873 = vsel %vm206, %v871, %v872
        %v877 = vsub.f32 %v864, %v871
        %v878 = vsub.f32 %v865, %v873
        %v879 = vsub.f32 %v866, %v872
        %s880 = scalar_lea.vmem %s46, 32 [#allocation4]
        %881 = vst [vmem:[%s880 - $0x7] sm:$0x80] %v877
        %882 = vst [vmem:[%s880 + $0x1] sm:$0xff] %v878
        %883 = vst [vmem:[%s880 + $0x9] sm:$0x7f] %v879
        %s884 = sand.u32 %s19, 1
        %s885 = scalar_lea.sflag [#allocation5], %s884
        %s886 = sand.u32 %s19, 1
        %s887 = smul.addr %s886, 48
        %s888 = scalar_lea.vmem [#allocation4], %s887
        // Predicated region
        $region115: #{srm_conv.1} parent=11 // pred_check
          %p889 = pneg %p25
        $region116: #{srm_conv.1} parent=11 // pred_check_branch
          %891 = sbr.rel (%p889) target = $region118
        $region117: #{srm_conv.1} parent=11 // pred_region
          %s892 = smul.u32 3, %s10
          %s894 = ssub.s32 768, 768
          %895 = vsyncadd %s885, %s894
          %s896 = smul.addr %s892, 2
          %s897 = smul.addr %s896, 128
          %s898 = scalar_lea.hbm %s1, %s897
          %s899 = sshll.u32 %s888, 4
          %s900 = int_to_ptr.vmem [resolvable:$true] %s899
          %905 = dma.vmem_to_hbm [thread:$0]  %s900, 768, %s898, %s885, 128, 128, 8
        $region118: #{srm_conv.1} parent=11 // pred_fallthru
          _
      $region12: #{srm_conv.1} parent=5 // pred_fallthru
        _
      %p906 = scmp.le.s32.totalorder 1, %s10
      // Predicated region
      $region119: #{srm_conv.1} parent=5 // pred_check
        %p907 = pneg %p906
      $region120: #{srm_conv.1} parent=5 // pred_check_branch
        %909 = sbr.rel (%p907) target = $region122
      $region121: #{srm_conv.1} parent=5 // pred_region
        %s910 = ssub.s32 %s10, 1
        // Predicated region
        $region123: #{srm_conv.1} parent=121 // pred_check
          %p911 = pneg %p31
        $region124: #{srm_conv.1} parent=121 // pred_check_branch
          %913 = sbr.rel (%p911) target = $region126
        $region125: #{srm_conv.1} parent=121 // pred_region
          %s914 = sand.u32 %s22, 1
          %s915 = scalar_lea.sflag [#allocation5], %s914
          %s916 = sand.u32 %s22, 1
          %s917 = smul.addr %s916, 48
          %s918 = scalar_lea.vmem [#allocation4], %s917
          %919 = dma.done %s915, 768
        $region126: #{srm_conv.1} parent=121 // pred_fallthru
          _
      $region122: #{srm_conv.1} parent=5 // pred_fallthru
        _
    $region6: #{srm_conv.1} parent=1 // loop_footer
      %s14 = sadd.s32 1, %s10
    $region7: #{srm_conv.1} parent=1 // loop_footer_branch
      %9 = sbr.rel target = $region3
    $region8: #{srm_conv.1} parent=1 // loop_exit
      _
    %920 = vsyncpa [#allocation5], 1
    %s921 = scalar_lea.sflag [#allocation5], 1
    %922 = vsyncpa %s921, 1
  %923 = vsyncmov [#allocation3]
  %s924 = vpop.sfrf %923
  %p925 = scmp.eq.s32.totalorder %s924, 0
  %p926 = pneg %p925
  %928 = shalt.err (%p926)
  %s929 = scalar_lea.sflag [#allocation3], 1
  %930 = vsyncmov %s929
  %s931 = vpop.sfrf %930
  %p932 = scmp.eq.s32.totalorder %s931, 0
  %p933 = pneg %p932
  %935 = shalt.err (%p933)

</llo_original>
